<compile_context>
chip_gen: v6e
topology: v6e:2x2x1
jax: 0.10.0
libtpu: 0.0.40
codegen_flags: <defaults>
</compile_context>

<pallas_src>
import functools

import jax
import jax.numpy as jnp
from jax.experimental import pallas as pl
from jax.experimental.pallas import tpu as pltpu

EPS = 1e-5  # nn.BatchNorm2d default


# ------------------------------- fused kernel -------------------------------

def _fused_block_kernel(xcol_ref, xaug_ref, w1_ref, w2_ref, wsc_ref, p_ref, o_ref, *,
                        n_batch):
    """Whole residual block in one kernel (3 matmuls total).

    xcol_ref: (9*N, 9*Cin)     conv1 im2col rows; rows=(oi,oj,n), cols=(kh,kw,ci)
    xaug_ref: (N*H*W, Cin+N)   [x_flat | per-sample one-hot]; rows=(n,h,w)
    w1_ref  : (9*Cin, Cout)    compact conv1 weight, rows=(kh,kw,ci)
    w2_ref  : (9*Cout, Cout)   compact conv2 weight, rows=(kh,kw,c)
    wsc_ref : (Cin, Cout)      true 1x1 shortcut weight
    p_ref   : (5, Cout)        packed [g1, be1, g2, be2, b_shortcut]
    o_ref   : (N*H*W, Cout)    rows=(n,h,w)
    """
    p = p_ref[...]
    g1, be1 = p[0:1, :], p[1:2, :]
    g2, be2 = p[2:3, :], p[3:4, :]
    b_sc = p[4:5, :]

    # ---- conv1: one compact im2col matmul (pre-BN bias cancels inside BN) ----
    y1 = jnp.dot(xcol_ref[...], w1_ref[...],
                 preferred_element_type=jnp.float32)            # (9N, Cout)

    # ---- BatchNorm1 (training batch stats, centered two-pass) + ReLU ---------
    m1 = jnp.mean(y1, axis=0, keepdims=True)                    # (1, Cout)
    d1 = y1 - m1
    v1 = jnp.mean(d1 * d1, axis=0, keepdims=True)
    a1 = jnp.maximum(d1 * (g1 * jax.lax.rsqrt(v1 + EPS)) + be1, 0.0)

    # ---- conv2: lane-flatten the 3x3 activation per sample -> ONE matmul -----
    # a1 rows are (p=oi*3+oj, n); slice the N rows of each p and concat along lanes.
    a1_flat = jnp.concatenate(
        [a1[t * n_batch:(t + 1) * n_batch, :] for t in range(9)], axis=1)   # (N, 9*Cout)
    y2 = jnp.dot(a1_flat, w2_ref[...],
                 preferred_element_type=jnp.float32)            # (N, Cout)

    # ---- BatchNorm2 (training batch stats over the N samples) ----------------
    m2 = jnp.mean(y2, axis=0, keepdims=True)
    d2 = y2 - m2
    v2 = jnp.mean(d2 * d2, axis=0, keepdims=True)
    fx = d2 * (g2 * jax.lax.rsqrt(v2 + EPS)) + be2               # (N, Cout) == Fx(N,C,1,1)

    # ---- shortcut 1x1 conv + bias + broadcast residual add + ReLU ------------
    # xaug = [x_flat | sel]; waug = [wsc ; fx+b_sc]  =>  xaug@waug = x@wsc + b_sc + fx[n].
    waug = jnp.concatenate([wsc_ref[...], fx + b_sc], axis=0)    # (Cin+N, Cout)
    out = jnp.dot(xaug_ref[...], waug,
                  preferred_element_type=jnp.float32)            # (N*H*W, Cout)
    o_ref[...] = jnp.maximum(out, 0.0)                           # single full-ref store


# ------------------------------- host wrapper --------------------------------

@functools.partial(jax.jit, static_argnames=("use_conv1d", "strides"))
def shallow_residual_block(x, params, *, use_conv1d=True, strides=1):
    assert use_conv1d and strides == 1, "only the configuration where the PyTorch forward is valid"
    n, cin, h, w = x.shape
    cout = params["w1"].shape[0]
    assert h == 5 and w == 5, "Fx (N,C,1,1) + X broadcast requires 5x5 input (as in PyTorch)"
    ho, wo = h - 2, w - 2                                        # conv1 output spatial = 3x3

    # NCHW -> NHWC once.  (At scale the caller should stay NHWC end-to-end; at this size
    # these layout ops are one-time data prep.)
    x_nhwc = x.transpose(0, 2, 3, 1)                             # (N, H, W, Cin)

    # conv1 im2col rows, ordered (oi, oj, n) so the kernel's conv2 flatten uses contiguous slices
    taps = [x_nhwc[:, di:di + ho, dj:dj + wo, :]
            for di in range(3) for dj in range(3)]               # 9 x (N, ho, wo, Cin)
    xcol = jnp.stack(taps, axis=3)                               # (N, ho, wo, 9, Cin)
    xcol = xcol.transpose(1, 2, 0, 3, 4).reshape(ho * wo * n, 9 * cin)

    # shortcut rows + residual-broadcast selector, fused into one operand
    x_flat = x_nhwc.reshape(n * h * w, cin)                      # rows = (n, h, w)
    sel = jnp.repeat(jnp.eye(n, dtype=jnp.float32), h * w, axis=0)   # (N*H*W, N) one-hot per row
    xaug = jnp.concatenate([x_flat.astype(jnp.float32), sel], axis=1)  # (N*H*W, Cin+N)

    # compact weights (no zero inflation); pre-BN conv biases b1/b2 omitted (exact no-ops)
    w1c = params["w1"].transpose(2, 3, 1, 0).reshape(9 * cin, cout)    # rows = (kh, kw, ci)
    w2c = params["w2"].transpose(2, 3, 1, 0).reshape(9 * cout, cout)   # rows = (kh, kw, c)
    wsc = params["w1d"][:, :, 0, 0].T                                  # (Cin, Cout)
    pk = jnp.stack([params["g1"], params["be1"], params["g2"], params["be2"],
                    params["b1d"]], axis=0).astype(jnp.float32)        # (5, Cout)

    kern = functools.partial(_fused_block_kernel, n_batch=n)
    vmem = lambda: pl.BlockSpec(memory_space=pltpu.MemorySpace.VMEM)
    out2d = pl.pallas_call(
        kern,
        out_shape=jax.ShapeDtypeStruct((n * h * w, cout), jnp.float32),
        in_specs=[vmem(), vmem(), vmem(), vmem(), vmem(), vmem()],
        out_specs=vmem(),
        compiler_params=pltpu.CompilerParams(vmem_limit_bytes=32 * 1024 * 1024),
    )(xcol, xaug, w1c, w2c, wsc, pk)

    return out2d.reshape(n, h, w, cout).transpose(0, 3, 1, 2)    # back to NCHW


# ------------------------------- parameters ----------------------------------

def init_params(key, cin, cout, use_conv1d):
    ks = jax.random.split(key, 10)

    def uni(k, shape, fan_in):  # PyTorch-style uniform(-1/sqrt(fan), 1/sqrt(fan))
        bound = 1.0 / jnp.sqrt(jnp.float32(fan_in))
        return jax.random.uniform(k, shape, jnp.float32, -bound, bound)

    p = dict(
        w1=uni(ks[0], (cout, cin, 3, 3), cin * 9),
        b1=uni(ks[1], (cout,), cin * 9),     # kept for interface; cancels inside BN
        w2=uni(ks[2], (cout, cout, 3, 3), cout * 9),
        b2=uni(ks[3], (cout,), cout * 9),    # kept for interface; cancels inside BN
        g1=1.0 + 0.1 * jax.random.normal(ks[4], (cout,), jnp.float32),
        be1=0.1 * jax.random.normal(ks[5], (cout,), jnp.float32),
        g2=1.0 + 0.1 * jax.random.normal(ks[6], (cout,), jnp.float32),
        be2=0.1 * jax.random.normal(ks[7], (cout,), jnp.float32),
    )
    if use_conv1d:
        p["w1d"] = uni(ks[8], (cout, cin, 1, 1), cin)
        p["b1d"] = uni(ks[9], (cout,), cin)
    return p


# ------------------------------ pure-JAX reference ---------------------------

def _reference(x, params):
    def conv(x, w, b, stride):
        y = jax.lax.conv_general_dilated(
            x, w, (stride, stride), "VALID",
            dimension_numbers=("NCHW", "OIHW", "NCHW"))
        return y + b.reshape(1, -1, 1, 1)

    def bn(y, g, be):
        m = jnp.mean(y, axis=(0, 2, 3), keepdims=True)
        v = jnp.mean((y - m) ** 2, axis=(0, 2, 3), keepdims=True)
        return (y - m) / jnp.sqrt(v + EPS) * g.reshape(1, -1, 1, 1) + be.reshape(1, -1, 1, 1)

    fx = jnp.maximum(bn(conv(x, params["w1"], params["b1"], 1), params["g1"], params["be1"]), 0.0)
    fx = bn(conv(fx, params["w2"], params["b2"], 1), params["g2"], params["be2"])
    xr = conv(x, params["w1d"], params["b1d"], 1)
    return jnp.maximum(fx + xr, 0.0)


# ---------------------------------- main --------------------------------------

if __name__ == "__main__":
    key = jax.random.PRNGKey(0)
    kx, kp = jax.random.split(key)

    # in_channels=4, out_channels=8, use_conv1D=True, strides=1, input 2x4x5x5
    # (5x5 spatial is the configuration where the original PyTorch forward is valid:
    #  Fx ends up (N, 8, 1, 1) and broadcasts against the (N, 8, 5, 5) shortcut).
    N, CIN, COUT, H, W = 2, 4, 8, 5, 5
    x = jax.random.normal(kx, (N, CIN, H, W), jnp.float32)
    params = init_params(kp, CIN, COUT, use_conv1d=True)

    out = shallow_residual_block(x, params, use_conv1d=True, strides=1)
    out = jax.block_until_ready(out)

    ref = _reference(x, params)
    assert out.shape == (N, COUT, H, W) and out.dtype == jnp.float32
    assert jnp.allclose(out, ref, rtol=1e-2, atol=1e-2), "mismatch vs pure-JAX reference"

    # TODO(synk): BatchNorm running_mean/running_var buffer updates (training-time side
    # effect that does not affect the forward output) are not reproduced.
    print("KERNEL_OK")
</pallas_src>

<mosaic_0001>
module attributes {stable_mosaic.version = 11 : i64} {
  func.func @_fused_block_kernel(%arg0: memref<18x36xf32, #tpu.memory_space<vmem>>, %arg1: memref<50x6xf32, #tpu.memory_space<vmem>>, %arg2: memref<36x8xf32, #tpu.memory_space<vmem>>, %arg3: memref<72x8xf32, #tpu.memory_space<vmem>>, %arg4: memref<4x8xf32, #tpu.memory_space<vmem>>, %arg5: memref<5x8xf32, #tpu.memory_space<vmem>>, %arg6: memref<50x8xf32, #tpu.memory_space<vmem>>) attributes {dimension_semantics = [], scalar_prefetch = 0 : i64, scratch_operands = 0 : i64, tpu.core_type = #tpu.core_type<tc>} {
    %c0 = arith.constant 0 : index
    %c0_0 = arith.constant 0 : index
    %0 = vector.load %arg5[%c0, %c0_0] : memref<5x8xf32, #tpu.memory_space<vmem>>, vector<5x8xf32>
    %1 = vector.extract_strided_slice %0 {offsets = [0, 0], sizes = [1, 8], strides = [1, 1]} : vector<5x8xf32> to vector<1x8xf32>
    %2 = vector.extract_strided_slice %0 {offsets = [1, 0], sizes = [1, 8], strides = [1, 1]} : vector<5x8xf32> to vector<1x8xf32>
    %3 = vector.extract_strided_slice %0 {offsets = [2, 0], sizes = [1, 8], strides = [1, 1]} : vector<5x8xf32> to vector<1x8xf32>
    %4 = vector.extract_strided_slice %0 {offsets = [3, 0], sizes = [1, 8], strides = [1, 1]} : vector<5x8xf32> to vector<1x8xf32>
    %5 = vector.extract_strided_slice %0 {offsets = [4, 0], sizes = [1, 8], strides = [1, 1]} : vector<5x8xf32> to vector<1x8xf32>
    %c0_1 = arith.constant 0 : index
    %c0_2 = arith.constant 0 : index
    %6 = vector.load %arg0[%c0_1, %c0_2] : memref<18x36xf32, #tpu.memory_space<vmem>>, vector<18x36xf32>
    %c0_3 = arith.constant 0 : index
    %c0_4 = arith.constant 0 : index
    %7 = vector.load %arg2[%c0_3, %c0_4] : memref<36x8xf32, #tpu.memory_space<vmem>>, vector<36x8xf32>
    %cst = arith.constant dense<0.000000e+00> : vector<18x8xf32>
    %8 = tpu.matmul %6, %7, %cst {dimension_numbers = #tpu.dot_dimension_numbers<[1], [0], [0], [1], [0, 0, 1, 1], [], []>} : vector<18x36xf32>, vector<36x8xf32>, vector<18x8xf32> -> vector<18x8xf32>
    %cst_5 = arith.constant dense<0.000000e+00> : vector<8xf32>
    %9 = vector.multi_reduction <add>, %8, %cst_5 [0] : vector<18x8xf32> to vector<8xf32>
    %10 = vector.shape_cast %9 : vector<8xf32> to vector<1x8xf32>
    %cst_6 = arith.constant 1.800000e+01 : f32
    %11 = vector.broadcast %cst_6 : f32 to vector<1x8xf32>
    %12 = arith.divf %10, %11 : vector<1x8xf32>
    %13 = vector.broadcast %12 : vector<1x8xf32> to vector<18x8xf32>
    %14 = arith.subf %8, %13 : vector<18x8xf32>
    %15 = arith.mulf %14, %14 : vector<18x8xf32>
    %cst_7 = arith.constant dense<0.000000e+00> : vector<8xf32>
    %16 = vector.multi_reduction <add>, %15, %cst_7 [0] : vector<18x8xf32> to vector<8xf32>
    %17 = vector.shape_cast %16 : vector<8xf32> to vector<1x8xf32>
    %cst_8 = arith.constant 1.800000e+01 : f32
    %18 = vector.broadcast %cst_8 : f32 to vector<1x8xf32>
    %19 = arith.divf %17, %18 : vector<1x8xf32>
    %cst_9 = arith.constant 9.99999974E-6 : f32
    %20 = vector.broadcast %cst_9 : f32 to vector<1x8xf32>
    %21 = arith.addf %19, %20 : vector<1x8xf32>
    %22 = math.rsqrt %21 : vector<1x8xf32>
    %23 = arith.mulf %1, %22 : vector<1x8xf32>
    %24 = vector.broadcast %23 : vector<1x8xf32> to vector<18x8xf32>
    %25 = arith.mulf %14, %24 : vector<18x8xf32>
    %26 = vector.broadcast %2 : vector<1x8xf32> to vector<18x8xf32>
    %27 = arith.addf %25, %26 : vector<18x8xf32>
    %cst_10 = arith.constant 0.000000e+00 : f32
    %28 = vector.broadcast %cst_10 : f32 to vector<18x8xf32>
    %29 = arith.maximumf %27, %28 : vector<18x8xf32>
    %30 = vector.extract_strided_slice %29 {offsets = [0, 0], sizes = [2, 8], strides = [1, 1]} : vector<18x8xf32> to vector<2x8xf32>
    %31 = vector.extract_strided_slice %29 {offsets = [2, 0], sizes = [2, 8], strides = [1, 1]} : vector<18x8xf32> to vector<2x8xf32>
    %32 = vector.extract_strided_slice %29 {offsets = [4, 0], sizes = [2, 8], strides = [1, 1]} : vector<18x8xf32> to vector<2x8xf32>
    %33 = vector.extract_strided_slice %29 {offsets = [6, 0], sizes = [2, 8], strides = [1, 1]} : vector<18x8xf32> to vector<2x8xf32>
    %34 = vector.extract_strided_slice %29 {offsets = [8, 0], sizes = [2, 8], strides = [1, 1]} : vector<18x8xf32> to vector<2x8xf32>
    %35 = vector.extract_strided_slice %29 {offsets = [10, 0], sizes = [2, 8], strides = [1, 1]} : vector<18x8xf32> to vector<2x8xf32>
    %36 = vector.extract_strided_slice %29 {offsets = [12, 0], sizes = [2, 8], strides = [1, 1]} : vector<18x8xf32> to vector<2x8xf32>
    %37 = vector.extract_strided_slice %29 {offsets = [14, 0], sizes = [2, 8], strides = [1, 1]} : vector<18x8xf32> to vector<2x8xf32>
    %38 = vector.extract_strided_slice %29 {offsets = [16, 0], sizes = [2, 8], strides = [1, 1]} : vector<18x8xf32> to vector<2x8xf32>
    %39 = tpu.concatenate %30, %31, %32, %33, %34, %35, %36, %37, %38 in 1 : vector<2x8xf32>, vector<2x8xf32>, vector<2x8xf32>, vector<2x8xf32>, vector<2x8xf32>, vector<2x8xf32>, vector<2x8xf32>, vector<2x8xf32>, vector<2x8xf32> -> vector<2x72xf32>
    %c0_11 = arith.constant 0 : index
    %c0_12 = arith.constant 0 : index
    %40 = vector.load %arg3[%c0_11, %c0_12] : memref<72x8xf32, #tpu.memory_space<vmem>>, vector<72x8xf32>
    %cst_13 = arith.constant dense<0.000000e+00> : vector<2x8xf32>
    %41 = tpu.matmul %39, %40, %cst_13 {dimension_numbers = #tpu.dot_dimension_numbers<[1], [0], [0], [1], [0, 0, 1, 1], [], []>} : vector<2x72xf32>, vector<72x8xf32>, vector<2x8xf32> -> vector<2x8xf32>
    %cst_14 = arith.constant dense<0.000000e+00> : vector<8xf32>
    %42 = vector.multi_reduction <add>, %41, %cst_14 [0] : vector<2x8xf32> to vector<8xf32>
    %43 = vector.shape_cast %42 : vector<8xf32> to vector<1x8xf32>
    %cst_15 = arith.constant 2.000000e+00 : f32
    %44 = vector.broadcast %cst_15 : f32 to vector<1x8xf32>
    %45 = arith.divf %43, %44 : vector<1x8xf32>
    %46 = vector.broadcast %45 : vector<1x8xf32> to vector<2x8xf32>
    %47 = arith.subf %41, %46 : vector<2x8xf32>
    %48 = arith.mulf %47, %47 : vector<2x8xf32>
    %cst_16 = arith.constant dense<0.000000e+00> : vector<8xf32>
    %49 = vector.multi_reduction <add>, %48, %cst_16 [0] : vector<2x8xf32> to vector<8xf32>
    %50 = vector.shape_cast %49 : vector<8xf32> to vector<1x8xf32>
    %cst_17 = arith.constant 2.000000e+00 : f32
    %51 = vector.broadcast %cst_17 : f32 to vector<1x8xf32>
    %52 = arith.divf %50, %51 : vector<1x8xf32>
    %cst_18 = arith.constant 9.99999974E-6 : f32
    %53 = vector.broadcast %cst_18 : f32 to vector<1x8xf32>
    %54 = arith.addf %52, %53 : vector<1x8xf32>
    %55 = math.rsqrt %54 : vector<1x8xf32>
    %56 = arith.mulf %3, %55 : vector<1x8xf32>
    %57 = vector.broadcast %56 : vector<1x8xf32> to vector<2x8xf32>
    %58 = arith.mulf %47, %57 : vector<2x8xf32>
    %59 = vector.broadcast %4 : vector<1x8xf32> to vector<2x8xf32>
    %60 = arith.addf %58, %59 : vector<2x8xf32>
    %c0_19 = arith.constant 0 : index
    %c0_20 = arith.constant 0 : index
    %61 = vector.load %arg4[%c0_19, %c0_20] : memref<4x8xf32, #tpu.memory_space<vmem>>, vector<4x8xf32>
    %62 = vector.broadcast %5 : vector<1x8xf32> to vector<2x8xf32>
    %63 = arith.addf %60, %62 : vector<2x8xf32>
    %64 = tpu.concatenate %61, %63 in 0 : vector<4x8xf32>, vector<2x8xf32> -> vector<6x8xf32>
    %c0_21 = arith.constant 0 : index
    %c0_22 = arith.constant 0 : index
    %65 = vector.load %arg1[%c0_21, %c0_22] : memref<50x6xf32, #tpu.memory_space<vmem>>, vector<50x6xf32>
    %cst_23 = arith.constant dense<0.000000e+00> : vector<50x8xf32>
    %66 = tpu.matmul %65, %64, %cst_23 {dimension_numbers = #tpu.dot_dimension_numbers<[1], [0], [0], [1], [0, 0, 1, 1], [], []>} : vector<50x6xf32>, vector<6x8xf32>, vector<50x8xf32> -> vector<50x8xf32>
    %cst_24 = arith.constant 0.000000e+00 : f32
    %67 = vector.broadcast %cst_24 : f32 to vector<50x8xf32>
    %68 = arith.maximumf %66, %67 : vector<50x8xf32>
    %c0_25 = arith.constant 0 : index
    %c0_26 = arith.constant 0 : index
    %69 = vector.load %arg6[%c0_25, %c0_26] : memref<50x8xf32, #tpu.memory_space<vmem>>, vector<50x8xf32>
    tpu.vector_store %arg6[%c0_25, %c0_26], %68 {strides = array<i32>} : memref<50x8xf32, #tpu.memory_space<vmem>>, vector<50x8xf32>,
    return
  }
}

</mosaic_0001>

<llo_original>
// kernel: shallow_residual_block.1
$region0: #{shallow_residual_block.1}
  #allocation0 [shape = 'u32[]', space=smem, size = 0x4, offset = 0x4, fixed_abs, tag = 'smem constant byte address 0x4 - core index']
  #allocation1 [shape = 'u32[144,128]{1,0:T(1,128)}', space=vmem, size = 0x12000, scoped, tag = 'internal scratch']
  %s0 = inlined_call_operand.vmem [shape: f32[18,36], index: 0, kind: input, shape index: {}]
  %s1 = inlined_call_operand.vmem [shape: f32[50,6], index: 1, kind: input, shape index: {}]
  %s2 = inlined_call_operand.vmem [shape: f32[36,8], index: 2, kind: input, shape index: {}]
  %s3 = inlined_call_operand.vmem [shape: f32[72,8], index: 3, kind: input, shape index: {}]
  %s4 = inlined_call_operand.vmem [shape: f32[4,8], index: 4, kind: input, shape index: {}]
  %s5 = inlined_call_operand.vmem [shape: f32[5,8], index: 5, kind: input, shape index: {}]
  %s6 = inlined_call_operand.vmem [shape: f32[50,8], index: 6, kind: output, shape index: {}]
  %s7 = sld [smem:[#allocation0]]
  $region34: #{shallow_residual_block.1} parent=0
    _
  %s9 = ssub.s32 1, %s7
  %s10 = scalar_select 0, %s9, %s7
  // Predicated region
  $region2: #{shallow_residual_block.1} parent=0 // pred_check
    _
  $region3: #{shallow_residual_block.1} parent=0 // pred_check_branch
    %12 = sbr.rel (0) target = $region5
  $region4: #{shallow_residual_block.1} parent=0 // pred_region
    _
  $region5: #{shallow_residual_block.1} parent=0 // pred_fallthru
    _
  // Predicated region
  $region6: #{shallow_residual_block.1} parent=0 // pred_check
    _
  $region7: #{shallow_residual_block.1} parent=0 // pred_check_branch
    %14 = sbr.rel (0) target = $region9
  $region8: #{shallow_residual_block.1} parent=0 // pred_region
    _
  $region9: #{shallow_residual_block.1} parent=0 // pred_fallthru
    _
  // Predicated region
  $region10: #{shallow_residual_block.1} parent=0 // pred_check
    _
  $region11: #{shallow_residual_block.1} parent=0 // pred_check_branch
    %16 = sbr.rel (0) target = $region13
  $region12: #{shallow_residual_block.1} parent=0 // pred_region
    _
  $region13: #{shallow_residual_block.1} parent=0 // pred_fallthru
    _
  // Predicated region
  $region14: #{shallow_residual_block.1} parent=0 // pred_check
    _
  $region15: #{shallow_residual_block.1} parent=0 // pred_check_branch
    %18 = sbr.rel (0) target = $region17
  $region16: #{shallow_residual_block.1} parent=0 // pred_region
    _
  $region17: #{shallow_residual_block.1} parent=0 // pred_fallthru
    _
  // Predicated region
  $region18: #{shallow_residual_block.1} parent=0 // pred_check
    _
  $region19: #{shallow_residual_block.1} parent=0 // pred_check_branch
    %20 = sbr.rel (0) target = $region21
  $region20: #{shallow_residual_block.1} parent=0 // pred_region
    _
  $region21: #{shallow_residual_block.1} parent=0 // pred_fallthru
    _
  // Predicated region
  $region22: #{shallow_residual_block.1} parent=0 // pred_check
    _
  $region23: #{shallow_residual_block.1} parent=0 // pred_check_branch
    %22 = sbr.rel (0) target = $region25
  $region24: #{shallow_residual_block.1} parent=0 // pred_region
    _
  $region25: #{shallow_residual_block.1} parent=0 // pred_fallthru
    _
  %v23 = vld [vmem:[%s5] sm:$0x1f]
  %v24 = vld [vmem:[%s0] sm:$0xff]
  %v25 = vld [vmem:[%s0 + $0x8] sm:$0xff]
  %v26 = vld [vmem:[%s0 + $0x10] sm:$0x3]
  %v27 = vld [vmem:[%s2] sm:$0xff]
  %v28 = vld [vmem:[%s2 + $0x8] sm:$0xff]
  %v29 = vld [vmem:[%s2 + $0x10] sm:$0xff]
  %v30 = vld [vmem:[%s2 + $0x18] sm:$0xff]
  %v31 = vld [vmem:[%s2 + $0x20] sm:$0xf]
  %vm32 = vcmask 293888
  %v34 = vsel %vm32, %v24, 0
  %v37 = vsel %vm32, %v25, 0
  %v40 = vsel %vm32, %v26, 0
  %vm42 = vcmask 1043456
  %v44 = vsel %vm42, %v31, 0
  %46 = vmatprep.subr.mxu0 0.0
  %47 = vmatpush1.msra.mxu0 0.0
  %48 = vmatprep.subr.mxu0 0.0
  %49 = vmatpush1.msra.mxu0 0.0
  %50 = vmatprep.subr.mxu0 0.0
  %51 = vmatpush1.msra.mxu0 0.0
  %52 = vmatprep.subr.mxu0 0.0
  %53 = vmatpush1.msra.mxu0 0.0
  %54 = vmatprep.subr.mxu0 0.0
  %55 = vmatpush1.msra.mxu0 0.0
  %56 = vmatprep.subr.mxu0 0.0
  %57 = vmatpush1.msra.mxu0 0.0
  %58 = vmatprep.subr.mxu0 0.0
  %59 = vmatpush1.msra.mxu0 0.0
  %60 = vmatprep.subr.mxu0 0.0
  %61 = vmatpush1.msra.mxu0 0.0
  %62 = vmatprep.subr.mxu0 0.0
  %63 = vmatpush1.msra.mxu0 0.0
  %64 = vmatprep.subr.mxu0 0.0
  %65 = vmatpush1.msra.mxu0 0.0
  %66 = vmatprep.subr.mxu0 0.0
  %67 = vmatpush1.msra.mxu0 0.0
  %68 = vmatprep.subr.mxu0 0.0
  %69 = vmatpush1.msra.mxu0 %v44
  %70 = vmatprep.subr.mxu0 0.0
  %71 = vmatpush1.msra.mxu0 %v30
  %72 = vmatprep.subr.mxu0 0.0
  %73 = vmatpush1.msra.mxu0 %v29
  %74 = vmatprep.subr.mxu0 0.0
  %75 = vmatpush1.msra.mxu0 %v28
  %76 = vmatprep.subr.mxu0 0.0
  %77 = vmatpush1.msra.mxu0 %v27
  %78 = vmatprep.subr.mxu0 0.0
  %79 = vmatpush2.msra.mxu0 0.0
  %80 = vmatprep.subr.mxu0 0.0
  %81 = vmatpush2.msra.mxu0 0.0
  %82 = vmatprep.subr.mxu0 0.0
  %83 = vmatpush2.msra.mxu0 0.0
  %84 = vmatprep.subr.mxu0 0.0
  %85 = vmatpush2.msra.mxu0 0.0
  %86 = vmatprep.subr.mxu0 0.0
  %87 = vmatpush2.msra.mxu0 0.0
  %88 = vmatprep.subr.mxu0 0.0
  %89 = vmatpush2.msra.mxu0 0.0
  %90 = vmatprep.subr.mxu0 0.0
  %91 = vmatpush2.msra.mxu0 0.0
  %92 = vmatprep.subr.mxu0 0.0
  %93 = vmatpush2.msra.mxu0 0.0
  %94 = vmatprep.subr.mxu0 0.0
  %95 = vmatpush2.msra.mxu0 0.0
  %96 = vmatprep.subr.mxu0 0.0
  %97 = vmatpush2.msra.mxu0 0.0
  %98 = vmatprep.subr.mxu0 0.0
  %99 = vmatpush2.msra.mxu0 0.0
  %100 = vmatprep.subr.mxu0 0.0
  %101 = vmatpush2.msra.mxu0 0.0
  %102 = vmatprep.subr.mxu0 0.0
  %103 = vmatpush2.msra.mxu0 0.0
  %104 = vmatprep.subr.mxu0 0.0
  %105 = vmatpush2.msra.mxu0 0.0
  %106 = vmatprep.subr.mxu0 0.0
  %107 = vmatpush2.msra.mxu0 0.0
  %108 = vmatprep.subr.mxu0 0.0
  %109 = vmatpush2.msra.mxu0 0.0
  %110 = vmatprep.mubr.f32.mxu0 0.0
  %111 = vmatmul.mubr.f32.gmra.mxu0 %v34
  %v112 = vpop.f32.mrf.mxu0
  %v113 = vadd.f32 0.0, %v112
  %v114 = vpop.f32.mrf.mxu0
  %115 = vmatprep.mubr.f32.mxu0 0.0
  %116 = vmatmul.mubr.f32.gmra.mxu0 %v37
  %v117 = vpop.f32.mrf.mxu0
  %v118 = vadd.f32 0.0, %v117
  %v119 = vpop.f32.mrf.mxu0
  %120 = vmatprep.mubr.f32.mxu0 0.0
  %121 = vmatmul.mubr.f32.gmra.mxu0 %v40
  %v122 = vpop.f32.mrf.mxu0
  %v123 = vadd.f32 0.0, %v122
  %v124 = vpop.f32.mrf.mxu0
  %125 = vdwg.mxu0
  %vm126 = vcmask 64512
  %v127 = vsel %vm126, %v113, 0.0
  %v128 = vsel %vm126, %v118, 0.0
  %v129 = vadd.f32 %v127, %v128
  %vm130 = vcmask 58368
  %v131 = vsel %vm130, %v123, 0.0
  %v132 = vadd.f32 %v129, %v131
  %v133 = vrot.slane %v132, 4
  %v134 = vadd.f32 %v132, %v133
  %v135 = vrot.slane %v134, 2
  %v136 = vadd.f32 %v134, %v135
  %v137 = vrot.slane %v136, 1
  %v138 = vadd.f32 %v136, %v137
  %v139 = vrcp.pop 18.0
  %v140 = vmul.f32 %v138, %v139
  %v141 = vsub.f32 %v113, %v140
  %v142 = vsub.f32 %v118, %v140
  %v143 = vsub.f32 %v123, %v140
  %v144 = vmul.f32 %v141, %v141
  %v145 = vmul.f32 %v142, %v142
  %v146 = vmul.f32 %v143, %v143
  %v147 = vsel %vm126, %v144, 0.0
  %v148 = vsel %vm126, %v145, 0.0
  %v149 = vadd.f32 %v147, %v148
  %v150 = vsel %vm130, %v146, 0.0
  %v151 = vadd.f32 %v149, %v150
  %v152 = vrot.slane %v151, 4
  %v153 = vadd.f32 %v151, %v152
  %v154 = vrot.slane %v153, 2
  %v155 = vadd.f32 %v153, %v154
  %v156 = vrot.slane %v155, 1
  %v157 = vadd.f32 %v155, %v156
  %v158 = vmul.f32 %v157, %v139
  %v159 = vadd.f32 %v158, 1e-05
  %v160 = vrsqrt.pop %v159
  %v161 = vmul.f32 %v23, %v160
  %v162 = vlaneseq
  %v163 = vshrl.u32 %v162, 7
  %v164 = vsub.s32 0, %v163
  %v165 = vrot.slane %v161, %v164
  %v166 = vmul.f32 %v141, %v165
  %v167 = vmul.f32 %v142, %v165
  %v168 = vmul.f32 %v143, %v165
  %v169 = vlaneseq
  %v170 = vshrl.u32 %v169, 7
  %v171 = vsub.s32 1, %v170
  %v172 = vrot.slane %v23, %v171
  %v173 = vadd.f32 %v166, %v172
  %v174 = vadd.f32 %v167, %v172
  %v175 = vadd.f32 %v168, %v172
  %v176 = vmax.f32 %v173, 0.0
  %v177 = vmax.f32 %v174, 0.0
  %v178 = vmax.f32 %v175, 0.0
  %v180 = vrot.slane %v176, 2
  %181 = vrot.lane.b32.xlu0 %v180, 8
  %v182 = vpop.permute.xlu0 %181
  %v184 = vrot.slane %v176, 4
  %185 = vrot.lane.b32.xlu0 %v184, 16
  %v186 = vpop.permute.xlu0 %185
  %v188 = vrot.slane %v176, 6
  %189 = vrot.lane.b32.xlu0 %v188, 24
  %v190 = vpop.permute.xlu0 %189
  %193 = vrot.lane.b32.xlu0 %v177, 32
  %v194 = vpop.permute.xlu0 %193
  %v196 = vrot.slane %v177, 2
  %197 = vrot.lane.b32.xlu0 %v196, 40
  %v198 = vpop.permute.xlu0 %197
  %v200 = vrot.slane %v177, 4
  %201 = vrot.lane.b32.xlu0 %v200, 48
  %v202 = vpop.permute.xlu0 %201
  %v204 = vrot.slane %v177, 6
  %205 = vrot.lane.b32.xlu0 %v204, 56
  %v206 = vpop.permute.xlu0 %205
  %209 = vrot.lane.b32.xlu0 %v178, 64
  %v210 = vpop.permute.xlu0 %209
  %v212 = vsel %vm126, %v176, %v182
  %vm213 = vcmask 130048
  %v214 = vsel %vm213, %v212, %v186
  %vm215 = vcmask 195584
  %v216 = vsel %vm215, %v214, %v190
  %vm217 = vcmask 261120
  %v218 = vsel %vm217, %v216, %v194
  %vm219 = vcmask 326656
  %v220 = vsel %vm219, %v218, %v198
  %vm221 = vcmask 392192
  %v222 = vsel %vm221, %v220, %v202
  %vm223 = vcmask 457728
  %v224 = vsel %vm223, %v222, %v206
  %vm225 = vcmask 523264
  %v226 = vsel %vm225, %v224, %v210
  %v227 = vld [vmem:[%s3] sm:$0xff]
  %v228 = vld [vmem:[%s3 + $0x8] sm:$0xff]
  %v229 = vld [vmem:[%s3 + $0x10] sm:$0xff]
  %v230 = vld [vmem:[%s3 + $0x18] sm:$0xff]
  %v231 = vld [vmem:[%s3 + $0x20] sm:$0xff]
  %v232 = vld [vmem:[%s3 + $0x28] sm:$0xff]
  %v233 = vld [vmem:[%s3 + $0x30] sm:$0xff]
  %v234 = vld [vmem:[%s3 + $0x38] sm:$0xff]
  %v235 = vld [vmem:[%s3 + $0x40] sm:$0xff]
  %vm236 = vcmask 588800
  %v238 = vsel %vm236, %v226, 0
  %240 = vmatprep.subr.mxu0 0.0
  %241 = vmatpush1.msra.mxu0 0.0
  %242 = vmatprep.subr.mxu0 0.0
  %243 = vmatpush1.msra.mxu0 0.0
  %244 = vmatprep.subr.mxu0 0.0
  %245 = vmatpush1.msra.mxu0 0.0
  %246 = vmatprep.subr.mxu0 0.0
  %247 = vmatpush1.msra.mxu0 0.0
  %248 = vmatprep.subr.mxu0 0.0
  %249 = vmatpush1.msra.mxu0 0.0
  %250 = vmatprep.subr.mxu0 0.0
  %251 = vmatpush1.msra.mxu0 0.0
  %252 = vmatprep.subr.mxu0 0.0
  %253 = vmatpush1.msra.mxu0 0.0
  %254 = vmatprep.subr.mxu0 0.0
  %255 = vmatpush1.msra.mxu0 %v235
  %256 = vmatprep.subr.mxu0 0.0
  %257 = vmatpush1.msra.mxu0 %v234
  %258 = vmatprep.subr.mxu0 0.0
  %259 = vmatpush1.msra.mxu0 %v233
  %260 = vmatprep.subr.mxu0 0.0
  %261 = vmatpush1.msra.mxu0 %v232
  %262 = vmatprep.subr.mxu0 0.0
  %263 = vmatpush1.msra.mxu0 %v231
  %264 = vmatprep.subr.mxu0 0.0
  %265 = vmatpush1.msra.mxu0 %v230
  %266 = vmatprep.subr.mxu0 0.0
  %267 = vmatpush1.msra.mxu0 %v229
  %268 = vmatprep.subr.mxu0 0.0
  %269 = vmatpush1.msra.mxu0 %v228
  %270 = vmatprep.subr.mxu0 0.0
  %271 = vmatpush1.msra.mxu0 %v227
  %272 = vmatprep.subr.mxu0 0.0
  %273 = vmatpush2.msra.mxu0 0.0
  %274 = vmatprep.subr.mxu0 0.0
  %275 = vmatpush2.msra.mxu0 0.0
  %276 = vmatprep.subr.mxu0 0.0
  %277 = vmatpush2.msra.mxu0 0.0
  %278 = vmatprep.subr.mxu0 0.0
  %279 = vmatpush2.msra.mxu0 0.0
  %280 = vmatprep.subr.mxu0 0.0
  %281 = vmatpush2.msra.mxu0 0.0
  %282 = vmatprep.subr.mxu0 0.0
  %283 = vmatpush2.msra.mxu0 0.0
  %284 = vmatprep.subr.mxu0 0.0
  %285 = vmatpush2.msra.mxu0 0.0
  %286 = vmatprep.subr.mxu0 0.0
  %287 = vmatpush2.msra.mxu0 0.0
  %288 = vmatprep.subr.mxu0 0.0
  %289 = vmatpush2.msra.mxu0 0.0
  %290 = vmatprep.subr.mxu0 0.0
  %291 = vmatpush2.msra.mxu0 0.0
  %292 = vmatprep.subr.mxu0 0.0
  %293 = vmatpush2.msra.mxu0 0.0
  %294 = vmatprep.subr.mxu0 0.0
  %295 = vmatpush2.msra.mxu0 0.0
  %296 = vmatprep.subr.mxu0 0.0
  %297 = vmatpush2.msra.mxu0 0.0
  %298 = vmatprep.subr.mxu0 0.0
  %299 = vmatpush2.msra.mxu0 0.0
  %300 = vmatprep.subr.mxu0 0.0
  %301 = vmatpush2.msra.mxu0 0.0
  %302 = vmatprep.subr.mxu0 0.0
  %303 = vmatpush2.msra.mxu0 0.0
  %304 = vmatprep.mubr.f32.mxu0 0.0
  %305 = vmatmul.mubr.f32.gmra.mxu0 %v238
  %v306 = vpop.f32.mrf.mxu0
  %v307 = vadd.f32 0.0, %v306
  %v308 = vpop.f32.mrf.mxu0
  %309 = vdwg.mxu0
  %v310 = vsel %vm130, %v307, 0.0
  %v311 = vrot.slane %v310, 4
  %v312 = vadd.f32 %v310, %v311
  %v313 = vrot.slane %v312, 2
  %v314 = vadd.f32 %v312, %v313
  %v315 = vrot.slane %v314, 1
  %v316 = vadd.f32 %v314, %v315
  %v317 = vrcp.pop 2.0
  %v318 = vmul.f32 %v316, %v317
  %v319 = vsub.f32 %v307, %v318
  %v320 = vmul.f32 %v319, %v319
  %v321 = vsel %vm130, %v320, 0.0
  %v322 = vrot.slane %v321, 4
  %v323 = vadd.f32 %v321, %v322
  %v324 = vrot.slane %v323, 2
  %v325 = vadd.f32 %v323, %v324
  %v326 = vrot.slane %v325, 1
  %v327 = vadd.f32 %v325, %v326
  %v328 = vmul.f32 %v327, %v317
  %v329 = vadd.f32 %v328, 1e-05
  %v330 = vrsqrt.pop %v329
  %v331 = vmul.f32 %v23, %v330
  %v332 = vlaneseq
  %v333 = vshrl.u32 %v332, 7
  %v334 = vsub.s32 2, %v333
  %v335 = vrot.slane %v331, %v334
  %v336 = vmul.f32 %v319, %v335
  %v337 = vlaneseq
  %v338 = vshrl.u32 %v337, 7
  %v339 = vsub.s32 3, %v338
  %v340 = vrot.slane %v23, %v339
  %v341 = vadd.f32 %v336, %v340
  %v342 = vld [vmem:[%s4] sm:$0xf]
  %v343 = vlaneseq
  %v344 = vshrl.u32 %v343, 7
  %v345 = vsub.s32 4, %v344
  %v346 = vrot.slane %v23, %v345
  %v347 = vadd.f32 %v341, %v346
  %v349 = vrot.slane %v347, 4
  %v351 = vsel %vm42, %v342, %v349
  %v352 = vld [vmem:[%s1] sm:$0xff]
  %v353 = vld [vmem:[%s1 + $0x8] sm:$0xff]
  %v354 = vld [vmem:[%s1 + $0x10] sm:$0xff]
  %v355 = vld [vmem:[%s1 + $0x18] sm:$0xff]
  %v356 = vld [vmem:[%s1 + $0x20] sm:$0xff]
  %v357 = vld [vmem:[%s1 + $0x28] sm:$0xff]
  %v358 = vld [vmem:[%s1 + $0x30] sm:$0x3]
  %vm359 = vcmask 48128
  %v361 = vsel %vm359, %v352, 0
  %v364 = vsel %vm359, %v353, 0
  %v367 = vsel %vm359, %v354, 0
  %v370 = vsel %vm359, %v355, 0
  %v373 = vsel %vm359, %v356, 0
  %v376 = vsel %vm359, %v357, 0
  %v379 = vsel %vm359, %v358, 0
  %vm381 = vcmask 1045504
  %v383 = vsel %vm381, %v351, 0
  %385 = vmatprep.subr.mxu0 0.0
  %386 = vmatpush1.msra.mxu0 0.0
  %387 = vmatprep.subr.mxu0 0.0
  %388 = vmatpush1.msra.mxu0 0.0
  %389 = vmatprep.subr.mxu0 0.0
  %390 = vmatpush1.msra.mxu0 0.0
  %391 = vmatprep.subr.mxu0 0.0
  %392 = vmatpush1.msra.mxu0 0.0
  %393 = vmatprep.subr.mxu0 0.0
  %394 = vmatpush1.msra.mxu0 0.0
  %395 = vmatprep.subr.mxu0 0.0
  %396 = vmatpush1.msra.mxu0 0.0
  %397 = vmatprep.subr.mxu0 0.0
  %398 = vmatpush1.msra.mxu0 0.0
  %399 = vmatprep.subr.mxu0 0.0
  %400 = vmatpush1.msra.mxu0 0.0
  %401 = vmatprep.subr.mxu0 0.0
  %402 = vmatpush1.msra.mxu0 0.0
  %403 = vmatprep.subr.mxu0 0.0
  %404 = vmatpush1.msra.mxu0 0.0
  %405 = vmatprep.subr.mxu0 0.0
  %406 = vmatpush1.msra.mxu0 0.0
  %407 = vmatprep.subr.mxu0 0.0
  %408 = vmatpush1.msra.mxu0 0.0
  %409 = vmatprep.subr.mxu0 0.0
  %410 = vmatpush1.msra.mxu0 0.0
  %411 = vmatprep.subr.mxu0 0.0
  %412 = vmatpush1.msra.mxu0 0.0
  %413 = vmatprep.subr.mxu0 0.0
  %414 = vmatpush1.msra.mxu0 0.0
  %415 = vmatprep.subr.mxu0 0.0
  %416 = vmatpush1.msra.mxu0 %v383
  %417 = vmatprep.subr.mxu0 0.0
  %418 = vmatpush2.msra.mxu0 0.0
  %419 = vmatprep.subr.mxu0 0.0
  %420 = vmatpush2.msra.mxu0 0.0
  %421 = vmatprep.subr.mxu0 0.0
  %422 = vmatpush2.msra.mxu0 0.0
  %423 = vmatprep.subr.mxu0 0.0
  %424 = vmatpush2.msra.mxu0 0.0
  %425 = vmatprep.subr.mxu0 0.0
  %426 = vmatpush2.msra.mxu0 0.0
  %427 = vmatprep.subr.mxu0 0.0
  %428 = vmatpush2.msra.mxu0 0.0
  %429 = vmatprep.subr.mxu0 0.0
  %430 = vmatpush2.msra.mxu0 0.0
  %431 = vmatprep.subr.mxu0 0.0
  %432 = vmatpush2.msra.mxu0 0.0
  %433 = vmatprep.subr.mxu0 0.0
  %434 = vmatpush2.msra.mxu0 0.0
  %435 = vmatprep.subr.mxu0 0.0
  %436 = vmatpush2.msra.mxu0 0.0
  %437 = vmatprep.subr.mxu0 0.0
  %438 = vmatpush2.msra.mxu0 0.0
  %439 = vmatprep.subr.mxu0 0.0
  %440 = vmatpush2.msra.mxu0 0.0
  %441 = vmatprep.subr.mxu0 0.0
  %442 = vmatpush2.msra.mxu0 0.0
  %443 = vmatprep.subr.mxu0 0.0
  %444 = vmatpush2.msra.mxu0 0.0
  %445 = vmatprep.subr.mxu0 0.0
  %446 = vmatpush2.msra.mxu0 0.0
  %447 = vmatprep.subr.mxu0 0.0
  %448 = vmatpush2.msra.mxu0 0.0
  %449 = vmatprep.mubr.f32.mxu0 0.0
  %450 = vmatmul.mubr.f32.gmra.mxu0 %v361
  %v451 = vpop.f32.mrf.mxu0
  %v452 = vadd.f32 0.0, %v451
  %v453 = vpop.f32.mrf.mxu0
  %454 = vmatprep.mubr.f32.mxu0 0.0
  %455 = vmatmul.mubr.f32.gmra.mxu0 %v364
  %v456 = vpop.f32.mrf.mxu0
  %v457 = vadd.f32 0.0, %v456
  %v458 = vpop.f32.mrf.mxu0
  %459 = vmatprep.mubr.f32.mxu0 0.0
  %460 = vmatmul.mubr.f32.gmra.mxu0 %v367
  %v461 = vpop.f32.mrf.mxu0
  %v462 = vadd.f32 0.0, %v461
  %v463 = vpop.f32.mrf.mxu0
  %464 = vmatprep.mubr.f32.mxu0 0.0
  %465 = vmatmul.mubr.f32.gmra.mxu0 %v370
  %v466 = vpop.f32.mrf.mxu0
  %v467 = vadd.f32 0.0, %v466
  %v468 = vpop.f32.mrf.mxu0
  %469 = vmatprep.mubr.f32.mxu0 0.0
  %470 = vmatmul.mubr.f32.gmra.mxu0 %v373
  %v471 = vpop.f32.mrf.mxu0
  %v472 = vadd.f32 0.0, %v471
  %v473 = vpop.f32.mrf.mxu0
  %474 = vmatprep.mubr.f32.mxu0 0.0
  %475 = vmatmul.mubr.f32.gmra.mxu0 %v376
  %v476 = vpop.f32.mrf.mxu0
  %v477 = vadd.f32 0.0, %v476
  %v478 = vpop.f32.mrf.mxu0
  %479 = vmatprep.mubr.f32.mxu0 0.0
  %480 = vmatmul.mubr.f32.gmra.mxu0 %v379
  %v481 = vpop.f32.mrf.mxu0
  %v482 = vadd.f32 0.0, %v481
  %v483 = vpop.f32.mrf.mxu0
  %484 = vdwg.mxu0
  %v485 = vmax.f32 %v452, 0.0
  %v486 = vmax.f32 %v457, 0.0
  %v487 = vmax.f32 %v462, 0.0
  %v488 = vmax.f32 %v467, 0.0
  %v489 = vmax.f32 %v472, 0.0
  %v490 = vmax.f32 %v477, 0.0
  %v491 = vmax.f32 %v482, 0.0
  %492 = vst.msk [vmem:[%s6] sm:$0xff] %vm126, %v485
  %493 = vst.msk [vmem:[%s6 + $0x8] sm:$0xff] %vm126, %v486
  %494 = vst.msk [vmem:[%s6 + $0x10] sm:$0xff] %vm126, %v487
  %495 = vst.msk [vmem:[%s6 + $0x18] sm:$0xff] %vm126, %v488
  %496 = vst.msk [vmem:[%s6 + $0x20] sm:$0xff] %vm126, %v489
  %497 = vst.msk [vmem:[%s6 + $0x28] sm:$0xff] %vm126, %v490
  %498 = vst.msk [vmem:[%s6 + $0x30] sm:$0x3] %vm130, %v491
  // Predicated region
  $region26: #{shallow_residual_block.1} parent=0 // pred_check
    _
  $region27: #{shallow_residual_block.1} parent=0 // pred_check_branch
    %500 = sbr.rel (0) target = $region29
  $region28: #{shallow_residual_block.1} parent=0 // pred_region
    _
  $region29: #{shallow_residual_block.1} parent=0 // pred_fallthru
    _
  // Predicated region
  $region30: #{shallow_residual_block.1} parent=0 // pred_check
    _
  $region31: #{shallow_residual_block.1} parent=0 // pred_check_branch
    %502 = sbr.rel (0) target = $region33
  $region32: #{shallow_residual_block.1} parent=0 // pred_region
    _
  $region33: #{shallow_residual_block.1} parent=0 // pred_fallthru
    _

</llo_original>
